<compile_context>
chip_gen: v7x
topology: tpu7x:2x2x1
jax: 0.10.0
libtpu: 0.0.40
codegen_flags: <defaults>
</compile_context>

<pallas_src>
import jax
import jax.numpy as jnp
from jax.experimental import pallas as pl
from jax.experimental.pallas import tpu as pltpu


def _linear_relu_kernel(x_ref, w_ref, o_ref):
    # x_ref: (TB, D) tile, w_ref: (1, D) resident weight, o_ref: (TB, 1) tile.
    # VPU multiply (broadcast over rows) + XLU lane reduce; accumulate in f32.
    prod = x_ref[...].astype(jnp.float32) * w_ref[...].astype(jnp.float32)
    acc = jnp.sum(prod, axis=-1, keepdims=True)
    o_ref[...] = jnp.maximum(acc, 0.0).astype(o_ref.dtype)


def _pick_tile_rows(B, D, itemsize=4):
    # Keep one x buffer <= ~16 MiB (double-buffered -> ~32 MiB), cap at 1024 rows.
    budget = 16 * 1024 * 1024
    tb = budget // max(D * itemsize, 1)
    tb = min(tb, 1024)
    if tb >= B:
        return B                      # full batch in one block (always layout-legal)
    return max(8, (tb // 8) * 8)      # partial blocks must have sublane dim % 8 == 0


def single_layer_forward(x, weight):
    """x: (B, D) f32, weight: (1, D) f32 (PyTorch nn.Linear convention). Returns (B, 1)."""
    B, D = x.shape
    assert weight.shape == (1, D)

    tb = _pick_tile_rows(B, D, jnp.dtype(x.dtype).itemsize)
    grid = (pl.cdiv(B, tb),)

    cost = pl.CostEstimate(
        flops=2 * B * D,
        transcendentals=0,
        bytes_accessed=4 * (B * D + D + B),
    )

    return pl.pallas_call(
        _linear_relu_kernel,
        out_shape=jax.ShapeDtypeStruct((B, 1), x.dtype),
        grid_spec=pl.GridSpec(
            grid=grid,
            in_specs=[
                pl.BlockSpec((tb, D), lambda i: (i, 0)),   # x: streamed per batch tile
                pl.BlockSpec((1, D), lambda i: (0, 0)),    # weight: VMEM-resident
            ],
            out_specs=pl.BlockSpec((tb, 1), lambda i: (i, 0)),
        ),
        compiler_params=pltpu.CompilerParams(
            dimension_semantics=("parallel",),
        ),
        cost_estimate=cost,
    )(x, weight)


if __name__ == "__main__":
    key = jax.random.PRNGKey(0)
    kx, kw = jax.random.split(key)

    batch, input_dim = 8, 32
    x = jax.random.normal(kx, (batch, input_dim), dtype=jnp.float32)

    # Deterministic param init matching nn.Linear(input_dim, 1, bias=False) shape:
    # weight ~ U(-1/sqrt(input_dim), 1/sqrt(input_dim)), shape (1, input_dim).
    bound = 1.0 / jnp.sqrt(jnp.float32(input_dim))
    weight = jax.random.uniform(
        kw, (1, input_dim), dtype=jnp.float32, minval=-bound, maxval=bound
    )

    out = single_layer_forward(x, weight)
    out = jax.block_until_ready(out)

    # Reference check in plain JAX.
    ref = jnp.maximum(x @ weight.T, 0.0)
    assert out.shape == (batch, 1)
    assert jnp.allclose(out, ref, atol=1e-5, rtol=1e-5)

    print("KERNEL_OK")
</pallas_src>

<mosaic_0001>
module attributes {stable_mosaic.version = 11 : i64} {
  func.func @_linear_relu_kernel(%arg0: i32, %arg1: memref<8x32xf32, #tpu.memory_space<vmem>>, %arg2: memref<1x32xf32, #tpu.memory_space<vmem>>, %arg3: memref<8x1xf32, #tpu.memory_space<vmem>>) attributes {dimension_semantics = [#tpu.dimension_semantics<parallel>], iteration_bounds = array<i64: 1>, scalar_prefetch = 0 : i64, scratch_operands = 0 : i64, tpu.core_type = #tpu.core_type<tc>, window_params = [{transform_indices = @transform_0, window_bounds = array<i64: 8, 32>}, {pipeline_mode = #tpu.pipeline_mode<synchronous>, transform_indices = @transform_1, window_bounds = array<i64: 1, 32>}, {transform_indices = @transform_2, window_bounds = array<i64: 8, 1>}]} {
    %c0 = arith.constant 0 : index
    %c0_0 = arith.constant 0 : index
    %0 = vector.load %arg1[%c0, %c0_0] : memref<8x32xf32, #tpu.memory_space<vmem>>, vector<8x32xf32>
    %c0_1 = arith.constant 0 : index
    %c0_2 = arith.constant 0 : index
    %1 = vector.load %arg2[%c0_1, %c0_2] : memref<1x32xf32, #tpu.memory_space<vmem>>, vector<1x32xf32>
    %2 = vector.broadcast %1 : vector<1x32xf32> to vector<8x32xf32>
    %3 = arith.mulf %0, %2 : vector<8x32xf32>
    %cst = arith.constant dense<0.000000e+00> : vector<8xf32>
    %4 = vector.multi_reduction <add>, %3, %cst [1] : vector<8x32xf32> to vector<8xf32>
    %5 = vector.shape_cast %4 : vector<8xf32> to vector<8x1xf32>
    %cst_3 = arith.constant 0.000000e+00 : f32
    %6 = vector.broadcast %cst_3 : f32 to vector<8x1xf32>
    %7 = arith.maximumf %5, %6 : vector<8x1xf32>
    %c0_4 = arith.constant 0 : index
    %c0_5 = arith.constant 0 : index
    %8 = vector.load %arg3[%c0_4, %c0_5] : memref<8x1xf32, #tpu.memory_space<vmem>>, vector<8x1xf32>
    tpu.vector_store %arg3[%c0_4, %c0_5], %7 {strides = array<i32>} : memref<8x1xf32, #tpu.memory_space<vmem>>, vector<8x1xf32>,
    return
  }
  func.func @transform_0(%arg0: i32) -> (i32, i32) {
    %c0_i32 = arith.constant 0 : i32
    %c0_i32_0 = arith.constant 0 : i32
    return %arg0, %c0_i32 : i32, i32
  }
  func.func @transform_1(%arg0: i32) -> (i32, i32) {
    %c0_i32 = arith.constant 0 : i32
    %c0_i32_0 = arith.constant 0 : i32
    %c0_i32_1 = arith.constant 0 : i32
    return %c0_i32, %c0_i32_0 : i32, i32
  }
  func.func @transform_2(%arg0: i32) -> (i32, i32) {
    %c0_i32 = arith.constant 0 : i32
    %c0_i32_0 = arith.constant 0 : i32
    return %arg0, %c0_i32 : i32, i32
  }
}

</mosaic_0001>

<llo_original>
// kernel: tpu_custom_call.1
$region0: #{tpu_custom_call.1}
  #allocation0 [shape = 'u32[]', space=smem, size = 0x4, offset = 0x4, fixed_abs, tag = 'smem constant byte address 0x4 - core index']
  #allocation1 [shape = 'u32[144,128]{1,0:T(1,128)}', space=vmem, size = 0x12000, scoped, tag = 'internal scratch']
  %s0 = inlined_call_operand.hbm [shape: f32[8,32], index: 0, kind: input, shape index: {}]
  %s1 = inlined_call_operand.vmem [shape: f32[1,32], index: 1, kind: input, shape index: {}]
  %s2 = inlined_call_operand.vmem [shape: f32[8,1], index: 2, kind: output, shape index: {}]
  %s3 = sld [smem:[#allocation0]]
  $region22: #{tpu_custom_call.1} parent=0
    _
  %s5 = ssub.s32 1, %s3
  %s6 = scalar_select 0, %s5, %s3
  $region1: #{tpu_custom_call.1} parent=0
    #allocation2 [shape = 'u8[4096]{0}', space=vmem, size = 0x1000, scoped, tag = 'input window, operand 0, single buffered']
    #allocation3 [shape = 's32[1]{0}', space=sflag, size = 0x4, scoped, tag = 'scoped memory for tpu_custom_call.1']
    %7 = vsyncpa [#allocation3], 0
    // Predicated region
    $region2: #{tpu_custom_call.1} parent=1 // pred_check
      _
    $region3: #{tpu_custom_call.1} parent=1 // pred_check_branch
      %9 = sbr.rel (0) target = $region5
    $region4: #{tpu_custom_call.1} parent=1 // pred_region
      %s11 = ssub.s32 128, 128
      %12 = vsyncadd [#allocation3], %s11
      %s14 = sshll.u32 [#allocation2], 4
      %s15 = int_to_ptr.vmem [resolvable:$true] %s14
      %17 = dma.hbm_to_vmem [thread:$0]  %s0, 128, %s15, [#allocation3]
    $region5: #{tpu_custom_call.1} parent=1 // pred_fallthru
      _
    // Predicated region
    $region6: #{tpu_custom_call.1} parent=1 // pred_check
      _
    $region7: #{tpu_custom_call.1} parent=1 // pred_check_branch
      %19 = sbr.rel (0) target = $region9
    $region8: #{tpu_custom_call.1} parent=1 // pred_region
      _
    $region9: #{tpu_custom_call.1} parent=1 // pred_fallthru
      _
    // Predicated region
    $region10: #{tpu_custom_call.1} parent=1 // pred_check
      _
    $region11: #{tpu_custom_call.1} parent=1 // pred_check_branch
      %21 = sbr.rel (0) target = $region13
    $region12: #{tpu_custom_call.1} parent=1 // pred_region
      %22 = dma.done [#allocation3], 128
    $region13: #{tpu_custom_call.1} parent=1 // pred_fallthru
      _
    %v23 = vld [vmem:[#allocation2] sm:$0xff]
    %v24 = vld [vmem:[%s1] sm:$0x1]
    %v26 = vlaneseq
    %v27 = vshrl.u32 %v26, 7
    %v28 = vsub.s32 0, %v27
    %v29 = vrot.slane %v24, %v28
    %v31 = vmul.f32 %v23, %v29
    %vm32 = vcmask 261120
    %v33 = vsel %vm32, %v31, 0.0
    %34 = vadd.xlane.f32.xlu0 %v33
    %v35 = vpop.xlane.xlu0 %34
    %v36 = vmax.f32 %v35, 0.0
    %vm37 = vcmask 7168
    %38 = vst.msk [vmem:[%s2] sm:$0xff] %vm37, %v36
    // Predicated region
    $region14: #{tpu_custom_call.1} parent=1 // pred_check
      _
    $region15: #{tpu_custom_call.1} parent=1 // pred_check_branch
      %40 = sbr.rel (0) target = $region17
    $region16: #{tpu_custom_call.1} parent=1 // pred_region
      _
    $region17: #{tpu_custom_call.1} parent=1 // pred_fallthru
      _
    // Predicated region
    $region18: #{tpu_custom_call.1} parent=1 // pred_check
      _
    $region19: #{tpu_custom_call.1} parent=1 // pred_check_branch
      %42 = sbr.rel (0) target = $region21
    $region20: #{tpu_custom_call.1} parent=1 // pred_region
      _
    $region21: #{tpu_custom_call.1} parent=1 // pred_fallthru
      _
    %43 = vsyncpa [#allocation3], 1

</llo_original>
